<compile_context>
chip_gen: v7x
topology: tpu7x:2x2x1
jax: 0.10.0
libtpu: 0.0.40
codegen_flags: <defaults>
</compile_context>

<pallas_src>
import jax
import jax.numpy as jnp
from jax.experimental import pallas as pl
from jax.experimental.pallas import tpu as pltpu


_PREFERRED_LANES = (512, 256, 128)
_TARGET_TILE_BYTES = 4 << 20          # ~4 MiB per pipeline buffer
_VMEM_LIMIT_BYTES = 48 << 20          # explicit scoped-VMEM budget (all gens)


def _scale_kernel(scale_ref, x_ref, o_ref):
    # scale_ref: (1, 1) f32 scalar in SMEM; x_ref / o_ref: (tile_r, lane) VMEM.
    s = scale_ref[0, 0].astype(o_ref.dtype)   # cast once: native bf16 path
    o_ref[...] = x_ref[...] * s


def _round_up(a, b):
    return -(-a // b) * b


def scale_forward(x, scale):
    """Compute scale * x with a Pallas TPU kernel.

    x:     any-shaped float array (e.g. NCHW conv activations).
    scale: 0-d float parameter (kept as an f32 scalar in SMEM).
    """
    orig_shape = x.shape
    n = x.size
    dtype = x.dtype
    itemsize = jnp.dtype(dtype).itemsize
    flat = x.reshape(-1)
    scale_smem = jnp.asarray(scale, dtype=jnp.float32).reshape(1, 1)

    # --- lane-dense 2D slab (no pad in the common case) ----------------------
    lane = None
    for cand in _PREFERRED_LANES:
        if n % cand == 0:
            lane = cand
            break
    pad = 0
    if lane is None:
        if n < 128:
            lane = max(n, 1)                  # tiny input: single (1, n) block
        else:
            lane = 128                        # rare fallback: minimal pad
            pad = (-n) % lane
            flat = jnp.pad(flat, (0, pad))
    rows = (n + pad) // lane
    x2d = flat.reshape(rows, lane)

    # --- dtype-aware row tiling ----------------------------------------------
    sub = max(1, 32 // itemsize)              # sublane align: f32 8, bf16 16, i8 32
    if rows <= sub:
        tile_r = rows                         # full dim: tiny/short inputs
    else:
        target_rows = max(sub, _round_up(_TARGET_TILE_BYTES // (lane * itemsize), sub))
        # Keep at least 2 grid blocks when alignment allows (v7x megacore).
        half = _round_up(pl.cdiv(rows, 2), sub)
        tile_r = min(target_rows, half)
    grid_r = pl.cdiv(rows, tile_r)            # final block may be partial (masked)

    # TODO(synk): optionally sweep pipeline_mode=pl.Buffered(3) on the input
    # spec for a few extra percent of DMA overlap (VMEM headroom permits it).
    out2d = pl.pallas_call(
        _scale_kernel,
        out_shape=jax.ShapeDtypeStruct(x2d.shape, dtype),
        grid=(grid_r,),
        in_specs=[
            pl.BlockSpec(memory_space=pltpu.SMEM),            # f32 scalar param
            pl.BlockSpec((tile_r, lane), lambda i: (i, 0)),    # streamed tiles
        ],
        out_specs=pl.BlockSpec((tile_r, lane), lambda i: (i, 0)),
        compiler_params=pltpu.CompilerParams(
            dimension_semantics=("parallel",),                 # v7x: 2 TCs
            vmem_limit_bytes=_VMEM_LIMIT_BYTES,
        ),
    )(scale_smem, x2d)

    out_flat = out2d.reshape(-1)
    if pad:
        out_flat = out_flat[:n]
    return out_flat.reshape(orig_shape)


if __name__ == "__main__":
    key = jax.random.PRNGKey(0)

    # Small NCHW input consistent with a conv-style forward.
    x = jax.random.normal(key, (2, 4, 16, 16), dtype=jnp.float32)

    # Parameter init matches nn.Parameter(torch.zeros(())).
    scale_param = jnp.zeros((), dtype=jnp.float32)
    out = scale_forward(x, scale_param)
    jax.block_until_ready(out)
    assert out.shape == x.shape and out.dtype == x.dtype
    assert jnp.allclose(out, scale_param * x)

    # Nonzero scale value.
    out2 = scale_forward(x, jnp.float32(0.5))
    jax.block_until_ready(out2)
    assert jnp.allclose(out2, 0.5 * x, atol=1e-6)

    # Larger input: multi-tile pipelined path (grid >= 2, no padding needed).
    key2 = jax.random.PRNGKey(1)
    x_big = jax.random.normal(key2, (8, 64, 32, 32), dtype=jnp.float32)
    out3 = scale_forward(x_big, jnp.float32(-1.25))
    jax.block_until_ready(out3)
    assert out3.shape == x_big.shape
    assert jnp.allclose(out3, -1.25 * x_big, atol=1e-6)

    # Size not divisible by 128: exercises the rare pad fallback + partial block.
    x_odd = jax.random.normal(jax.random.PRNGKey(2), (3, 7, 11, 13), dtype=jnp.float32)
    out4 = scale_forward(x_odd, jnp.float32(2.0))
    jax.block_until_ready(out4)
    assert out4.shape == x_odd.shape
    assert jnp.allclose(out4, 2.0 * x_odd, atol=1e-6)

    # Tiny input path.
    x_tiny = jax.random.normal(jax.random.PRNGKey(3), (5,), dtype=jnp.float32)
    out5 = scale_forward(x_tiny, jnp.float32(3.0))
    jax.block_until_ready(out5)
    assert jnp.allclose(out5, 3.0 * x_tiny, atol=1e-6)

    # bf16 input: native low-precision multiply path.
    x_bf = jax.random.normal(jax.random.PRNGKey(4), (2, 4, 16, 16), dtype=jnp.bfloat16)
    out6 = scale_forward(x_bf, jnp.float32(0.5))
    jax.block_until_ready(out6)
    assert out6.dtype == jnp.bfloat16
    assert jnp.allclose(out6.astype(jnp.float32),
                        0.5 * x_bf.astype(jnp.float32), rtol=1e-2, atol=1e-2)

    print("KERNEL_OK")
</pallas_src>

<mosaic_0001>
module attributes {stable_mosaic.version = 11 : i64} {
  func.func @_scale_kernel(%arg0: i32, %arg1: memref<1x1xf32, #tpu.memory_space<smem>>, %arg2: memref<4x512xf32, #tpu.memory_space<vmem>>, %arg3: memref<4x512xf32, #tpu.memory_space<vmem>>) attributes {dimension_semantics = [#tpu.dimension_semantics<parallel>], iteration_bounds = array<i64: 1>, scalar_prefetch = 0 : i64, scratch_operands = 0 : i64, tpu.core_type = #tpu.core_type<tc>, window_params = [{transform_indices = @transform_0, window_bounds = array<i64: 1, 1>}, {transform_indices = @transform_1, window_bounds = array<i64: 4, 512>}, {transform_indices = @transform_2, window_bounds = array<i64: 4, 512>}]} {
    %c0 = arith.constant 0 : index
    %c0_0 = arith.constant 0 : index
    %0 = memref.load %arg1[%c0, %c0_0] : memref<1x1xf32, #tpu.memory_space<smem>>
    %c0_1 = arith.constant 0 : index
    %c0_2 = arith.constant 0 : index
    %1 = vector.load %arg2[%c0_1, %c0_2] : memref<4x512xf32, #tpu.memory_space<vmem>>, vector<4x512xf32>
    %2 = vector.broadcast %0 : f32 to vector<4x512xf32>
    %3 = arith.mulf %1, %2 : vector<4x512xf32>
    %c0_3 = arith.constant 0 : index
    %c0_4 = arith.constant 0 : index
    %4 = vector.load %arg3[%c0_3, %c0_4] : memref<4x512xf32, #tpu.memory_space<vmem>>, vector<4x512xf32>
    tpu.vector_store %arg3[%c0_3, %c0_4], %3 {strides = array<i32>} : memref<4x512xf32, #tpu.memory_space<vmem>>, vector<4x512xf32>,
    return
  }
  func.func @transform_0(%arg0: i32) -> (i32, i32) {
    %c0_i32 = arith.constant 0 : i32
    %c0_i32_0 = arith.constant 0 : i32
    %c0_i32_1 = arith.constant 0 : i32
    return %c0_i32, %c0_i32_0 : i32, i32
  }
  func.func @transform_1(%arg0: i32) -> (i32, i32) {
    %c0_i32 = arith.constant 0 : i32
    %c0_i32_0 = arith.constant 0 : i32
    return %arg0, %c0_i32 : i32, i32
  }
  func.func @transform_2(%arg0: i32) -> (i32, i32) {
    %c0_i32 = arith.constant 0 : i32
    %c0_i32_0 = arith.constant 0 : i32
    return %arg0, %c0_i32 : i32, i32
  }
}

</mosaic_0001>

<llo_original>
// kernel: tpu_custom_call.1
$region0: #{tpu_custom_call.1}
  #allocation0 [shape = 'u32[]', space=smem, size = 0x4, offset = 0x4, fixed_abs, tag = 'smem constant byte address 0x4 - core index']
  #allocation1 [shape = 'u32[144,128]{1,0:T(1,128)}', space=vmem, size = 0x12000, scoped, tag = 'internal scratch']
  #allocation2 [shape = 'f32[1,1]{1,0:T(1,128)S(6)}', space=smem, size = 0x200, scoped, tag = 'scoped memory for tpu_custom_call.1']
  %s0 = inlined_call_operand.<no memory space> [shape: f32[1,1], index: 0, kind: input, shape index: {}]
  %s1 = inlined_call_operand.hbm [shape: f32[4,512], index: 1, kind: input, shape index: {}]
  %s2 = inlined_call_operand.hbm [shape: f32[4,512], index: 2, kind: output, shape index: {}]
  %s3 = sld [smem:[#allocation0]]
  $region22: #{tpu_custom_call.1} parent=0
    _
  %s5 = ssub.s32 1, %s3
  %s6 = scalar_select 0, %s5, %s3
  %7 = sst [smem:[#allocation2]] %s0
  $region1: #{tpu_custom_call.1} parent=0
    #allocation3 [shape = 'u8[8192]{0}', space=vmem, size = 0x2000, scoped, tag = 'input window, operand 1, single buffered']
    #allocation4 [shape = 's32[1]{0}', space=sflag, size = 0x4, scoped, tag = 'scoped memory for tpu_custom_call.1']
    #allocation5 [shape = 's32[1]{0}', space=sflag, size = 0x4, scoped, tag = 'scoped memory for tpu_custom_call.1']
    #allocation6 [shape = 'u8[8192]{0}', space=vmem, size = 0x2000, scoped, tag = 'output window, operand 0, single buffered']
    %8 = vsyncpa [#allocation4], 0
    %9 = vsyncpa [#allocation5], 0
    // Predicated region
    $region2: #{tpu_custom_call.1} parent=1 // pred_check
      _
    $region3: #{tpu_custom_call.1} parent=1 // pred_check_branch
      %11 = sbr.rel (0) target = $region5
    $region4: #{tpu_custom_call.1} parent=1 // pred_region
      _
    $region5: #{tpu_custom_call.1} parent=1 // pred_fallthru
      _
    // Predicated region
    $region6: #{tpu_custom_call.1} parent=1 // pred_check
      _
    $region7: #{tpu_custom_call.1} parent=1 // pred_check_branch
      %13 = sbr.rel (0) target = $region9
    $region8: #{tpu_custom_call.1} parent=1 // pred_region
      %s15 = ssub.s32 256, 256
      %16 = vsyncadd [#allocation4], %s15
      %s18 = sshll.u32 [#allocation3], 4
      %s19 = int_to_ptr.vmem [resolvable:$true] %s18
      %21 = dma.hbm_to_vmem [thread:$0]  %s1, 256, %s19, [#allocation4]
    $region9: #{tpu_custom_call.1} parent=1 // pred_fallthru
      _
    // Predicated region
    $region10: #{tpu_custom_call.1} parent=1 // pred_check
      _
    $region11: #{tpu_custom_call.1} parent=1 // pred_check_branch
      %23 = sbr.rel (0) target = $region13
    $region12: #{tpu_custom_call.1} parent=1 // pred_region
      %24 = dma.done [#allocation4], 256
    $region13: #{tpu_custom_call.1} parent=1 // pred_fallthru
      _
    %s25 = sld [smem:[#allocation2]]
    %v26 = vld [vmem:[#allocation3] sm:$0xff]
    %v27 = vld [vmem:[#allocation3 + $0x8] sm:$0xff]
    %v28 = vstv %s25
    %v29 = vmul.f32 %v26, %v28
    %v30 = vmul.f32 %v27, %v28
    %31 = vst [vmem:[#allocation6] sm:$0xff] %v29
    %32 = vst [vmem:[#allocation6 + $0x8] sm:$0xff] %v30
    // Predicated region
    $region14: #{tpu_custom_call.1} parent=1 // pred_check
      _
    $region15: #{tpu_custom_call.1} parent=1 // pred_check_branch
      %34 = sbr.rel (0) target = $region17
    $region16: #{tpu_custom_call.1} parent=1 // pred_region
      %s36 = ssub.s32 256, 256
      %37 = vsyncadd [#allocation5], %s36
      %s39 = sshll.u32 [#allocation6], 4
      %s40 = int_to_ptr.vmem [resolvable:$true] %s39
      %42 = dma.vmem_to_hbm [thread:$0]  %s40, 256, %s2, [#allocation5]
    $region17: #{tpu_custom_call.1} parent=1 // pred_fallthru
      _
    // Predicated region
    $region18: #{tpu_custom_call.1} parent=1 // pred_check
      _
    $region19: #{tpu_custom_call.1} parent=1 // pred_check_branch
      %44 = sbr.rel (0) target = $region21
    $region20: #{tpu_custom_call.1} parent=1 // pred_region
      %45 = dma.done [#allocation5], 256
    $region21: #{tpu_custom_call.1} parent=1 // pred_fallthru
      _
    %46 = vsyncpa [#allocation4], 1
    %47 = vsyncpa [#allocation5], 1

</llo_original>
